<compile_context>
chip_gen: v7x
topology: tpu7x:2x2x1
jax: 0.10.0
libtpu: 0.0.40
codegen_flags: <defaults>
</compile_context>

<pallas_src>
import jax
import jax.numpy as jnp
import numpy as np
from jax.experimental import pallas as pl
from jax.experimental.pallas import tpu as pltpu

LANE = 128
BN_EPS = 1e-5


def _round_up(n, m):
    return ((n + m - 1) // m) * m


# --------------------------------------------------------------------------
# Kernel
# --------------------------------------------------------------------------
def _make_vae_kernel(HP, ZP, FP):
    def kernel(x_ref, eps_ref, wenc_ref, wz_ref, wmv_ref, wdec_ref, bn_ref,
               recon_ref, muvar_ref):
        x = x_ref[...]

        # Per-modality encoders fused into one block-diagonal matmul
        # (modality scale w_i folded into the weight): Linear -> ReLU -> BN.
        h = jnp.dot(x, wenc_ref[...], preferred_element_type=jnp.float32)
        h = jnp.maximum(h, 0.0)
        h = h * bn_ref[0:1, :HP] + bn_ref[1:2, :HP]

        # Shared encoder: Linear -> ReLU -> BN.
        z = jnp.dot(h, wz_ref[...], preferred_element_type=jnp.float32)
        z = jnp.maximum(z, 0.0)
        z = z * bn_ref[2:3, :ZP] + bn_ref[3:4, :ZP]

        # fc_mu / fc_var fused into a single matmul; BN scale folded into the
        # weight columns, BN shift applied as bias (no ReLU in between, so the
        # fold is exact). Dropout = identity in eval mode.
        mv = jnp.dot(z, wmv_ref[...], preferred_element_type=jnp.float32)
        mu = mv[:, :ZP] + bn_ref[4:5, :ZP]
        logvar = mv[:, ZP:] + bn_ref[5:6, :ZP]

        # Reparameterize: eps * exp(0.5*logvar) + mu.
        zz = eps_ref[...] * jnp.exp(0.5 * logvar) + mu

        # Per-modality decoders fused into one output-concatenated matmul:
        # Linear -> ReLU -> BN, single wide lane-dense store.
        r = jnp.dot(zz, wdec_ref[...], preferred_element_type=jnp.float32)
        r = jnp.maximum(r, 0.0)
        recon_ref[...] = r * bn_ref[6:7, :FP] + bn_ref[7:8, :FP]

        # Pack mu / logvar into one lane-dense output (128-aligned halves);
        # the wrapper splits them.
        muvar_ref[:, :ZP] = mu
        muvar_ref[:, ZP:2 * ZP] = logvar

    return kernel


# --------------------------------------------------------------------------
# Parameters (raw PyTorch-equivalent shapes)
# --------------------------------------------------------------------------
def init_params(key, num_features, num_hidden_features, z_dim):
    """Deterministic synthetic parameters matching the PyTorch module shapes."""
    params = []

    def linear_w(k, n_in, n_out):
        # Linear(n_in, n_out, bias=False) (bias=not bn, bn=True); stored
        # transposed as (n_in, n_out) so the kernel computes x @ W.
        bound = 1.0 / jnp.sqrt(jnp.float32(n_in))
        return jax.random.uniform(k, (n_in, n_out), jnp.float32, -bound, bound)

    def bn_scale_shift(n):
        # fresh BatchNorm1d in eval mode: gamma=1, beta=0, mean=0, var=1
        scale = jnp.full((1, n), 1.0 / jnp.sqrt(1.0 + BN_EPS), jnp.float32)
        shift = jnp.zeros((1, n), jnp.float32)
        return scale, shift

    keys = jax.random.split(key, 4 * len(num_features) + 8)
    ki = iter(range(len(keys)))

    # per-modality encoder branch: modality weight w_i, Linear, BN
    for f, h in zip(num_features, num_hidden_features):
        w = jax.random.uniform(keys[next(ki)], (1, f), jnp.float32) * 0.001
        W = linear_w(keys[next(ki)], f, h)
        sc, sh = bn_scale_shift(h)
        params += [w, W, sc, sh]

    # shared encoder
    W = linear_w(keys[next(ki)], sum(num_hidden_features), z_dim)
    sc, sh = bn_scale_shift(z_dim)
    params += [W, sc, sh]

    # fc_mu, fc_var
    for _ in range(2):
        W = linear_w(keys[next(ki)], z_dim, z_dim)
        sc, sh = bn_scale_shift(z_dim)
        params += [W, sc, sh]

    # decoder per modality
    for f in num_features:
        W = linear_w(keys[next(ki)], z_dim, f)
        sc, sh = bn_scale_shift(f)
        params += [W, sc, sh]

    return params


# --------------------------------------------------------------------------
# One-time host-side folding / packing / padding of parameters
# --------------------------------------------------------------------------
def fold_and_pack_params(params, num_features, num_hidden_features, z_dim):
    total_f, total_h = sum(num_features), sum(num_hidden_features)
    FP = _round_up(total_f, LANE)
    HP = _round_up(total_h, LANE)
    ZP = _round_up(z_dim, LANE)
    LP = max(FP, HP, ZP)

    p = [np.asarray(a, np.float32) for a in params]
    it = iter(p)

    # Block-diagonal encoder weight with modality scale w_i folded in.
    w_enc = np.zeros((FP, HP), np.float32)
    enc_sc = np.zeros((LP,), np.float32)
    enc_sh = np.zeros((LP,), np.float32)
    f0 = h0 = 0
    for f, h in zip(num_features, num_hidden_features):
        w, W, sc, sh = next(it), next(it), next(it), next(it)
        w_enc[f0:f0 + f, h0:h0 + h] = W * w.reshape(f, 1)
        enc_sc[h0:h0 + h] = sc[0]
        enc_sh[h0:h0 + h] = sh[0]
        f0 += f
        h0 += h

    # Shared encoder.
    W, sc, sh = next(it), next(it), next(it)
    w_z = np.zeros((HP, ZP), np.float32)
    w_z[:total_h, :z_dim] = W
    z_sc = np.zeros((LP,), np.float32); z_sc[:z_dim] = sc[0]
    z_sh = np.zeros((LP,), np.float32); z_sh[:z_dim] = sh[0]

    # fc_mu / fc_var fused; BN scale folded into weight, shift -> bias.
    Wmu, scm, shm = next(it), next(it), next(it)
    Wv, scv, shv = next(it), next(it), next(it)
    w_mv = np.zeros((ZP, 2 * ZP), np.float32)
    w_mv[:z_dim, :z_dim] = Wmu * scm[0][None, :]
    w_mv[:z_dim, ZP:ZP + z_dim] = Wv * scv[0][None, :]
    mu_b = np.zeros((LP,), np.float32); mu_b[:z_dim] = shm[0]
    var_b = np.zeros((LP,), np.float32); var_b[:z_dim] = shv[0]

    # Decoder weights concatenated along the output axis.
    w_dec = np.zeros((ZP, FP), np.float32)
    dec_sc = np.zeros((LP,), np.float32)
    dec_sh = np.zeros((LP,), np.float32)
    f0 = 0
    for f in num_features:
        W, sc, sh = next(it), next(it), next(it)
        w_dec[:z_dim, f0:f0 + f] = W
        dec_sc[f0:f0 + f] = sc[0]
        dec_sh[f0:f0 + f] = sh[0]
        f0 += f

    # All per-feature vectors packed into one (8, LP) array (single DMA).
    bn_pack = np.stack(
        [enc_sc, enc_sh, z_sc, z_sh, mu_b, var_b, dec_sc, dec_sh], axis=0)

    packed = tuple(jnp.asarray(a)
                   for a in (w_enc, w_z, w_mv, w_dec, bn_pack))
    return packed, (FP, HP, ZP, LP)


# --------------------------------------------------------------------------
# Wrapper: pad -> grid over batch -> pallas_call -> slice lane-dense outputs
# --------------------------------------------------------------------------
def snapshot_vae_forward(x, eps, packed_params, dims, num_features, z_dim,
                         batch_tile=256):
    FP, HP, ZP, LP = dims
    w_enc, w_z, w_mv, w_dec, bn_pack = packed_params
    n = x.shape[0]
    total_f = sum(num_features)

    tb = min(batch_tile, _round_up(n, 8))
    n_pad = _round_up(n, tb)

    x_pad = jnp.zeros((n_pad, FP), jnp.float32).at[:n, :total_f].set(x)
    eps_pad = jnp.zeros((n_pad, ZP), jnp.float32).at[:n, :z_dim].set(eps)

    kernel = _make_vae_kernel(HP, ZP, FP)

    def batch_spec(cols):
        return pl.BlockSpec((tb, cols), lambda i: (i, 0))

    def const_spec(shape):
        return pl.BlockSpec(shape, lambda i: (0, 0))

    recon_pad, muvar_pad = pl.pallas_call(
        kernel,
        out_shape=(jax.ShapeDtypeStruct((n_pad, FP), jnp.float32),
                   jax.ShapeDtypeStruct((n_pad, 2 * ZP), jnp.float32)),
        grid=(n_pad // tb,),
        in_specs=[
            batch_spec(FP),            # x (padded)
            batch_spec(ZP),            # eps (padded)
            const_spec((FP, HP)),      # block-diagonal encoder weight
            const_spec((HP, ZP)),      # shared encoder weight
            const_spec((ZP, 2 * ZP)),  # fused fc_mu / fc_var weight
            const_spec((ZP, FP)),      # concatenated decoder weight
            const_spec((8, LP)),       # packed BN scale/shift + mu/var biases
        ],
        out_specs=(batch_spec(FP), batch_spec(2 * ZP)),
        compiler_params=pltpu.CompilerParams(
            dimension_semantics=("parallel",)),
    )(x_pad, eps_pad, w_enc, w_z, w_mv, w_dec, bn_pack)

    recon = recon_pad[:n, :total_f]
    mu = muvar_pad[:n, :z_dim]
    logvar = muvar_pad[:n, ZP:ZP + z_dim]
    return recon, mu, logvar


# --------------------------------------------------------------------------
# Pure-JAX unfused reference (for correctness checking)
# --------------------------------------------------------------------------
def reference_forward(x, eps, params, num_features, num_hidden_features, z_dim):
    it = iter(params)
    hs = []
    start = 0
    for f, h in zip(num_features, num_hidden_features):
        w, W, sc, sh = next(it), next(it), next(it), next(it)
        xi = x[:, start:start + f] * w
        hs.append(jnp.maximum(xi @ W, 0.0) * sc + sh)
        start += f
    hcat = jnp.concatenate(hs, axis=1)
    W, sc, sh = next(it), next(it), next(it)
    z = jnp.maximum(hcat @ W, 0.0) * sc + sh
    Wmu, scm, shm = next(it), next(it), next(it)
    Wv, scv, shv = next(it), next(it), next(it)
    mu = (z @ Wmu) * scm + shm
    logvar = (z @ Wv) * scv + shv
    zz = eps * jnp.exp(0.5 * logvar) + mu
    outs = []
    for f in num_features:
        W, sc, sh = next(it), next(it), next(it)
        outs.append(jnp.maximum(zz @ W, 0.0) * sc + sh)
    return jnp.concatenate(outs, axis=1), mu, logvar


if __name__ == "__main__":
    num_features = [24, 16]          # per-modality input feature counts
    num_hidden_features = [16, 16]   # per-modality hidden sizes
    z_dim = 20
    batch = 8

    key = jax.random.PRNGKey(0)
    k_x, k_eps, k_params = jax.random.split(key, 3)

    x = jax.random.uniform(k_x, (batch, sum(num_features)), jnp.float32)
    eps = jax.random.normal(k_eps, (batch, z_dim), jnp.float32)  # reparam noise
    params = init_params(k_params, num_features, num_hidden_features, z_dim)

    packed, dims = fold_and_pack_params(
        params, num_features, num_hidden_features, z_dim)

    recon, mu, logvar = snapshot_vae_forward(
        x, eps, packed, dims, num_features, z_dim)
    jax.block_until_ready((recon, mu, logvar))

    assert recon.shape == (batch, sum(num_features))
    assert mu.shape == (batch, z_dim) and logvar.shape == (batch, z_dim)

    # Verify the fused/folded kernel against the unfused reference.
    r_ref, mu_ref, lv_ref = reference_forward(
        x, eps, params, num_features, num_hidden_features, z_dim)
    np.testing.assert_allclose(np.asarray(mu), np.asarray(mu_ref),
                               rtol=5e-2, atol=1e-2)
    np.testing.assert_allclose(np.asarray(logvar), np.asarray(lv_ref),
                               rtol=5e-2, atol=1e-2)
    np.testing.assert_allclose(np.asarray(recon), np.asarray(r_ref),
                               rtol=5e-2, atol=1e-2)

    print("KERNEL_OK")
</pallas_src>

<mosaic_0001>
module attributes {stable_mosaic.version = 11 : i64} {
  func.func @kernel(%arg0: i32, %arg1: memref<8x128xf32, #tpu.memory_space<vmem>>, %arg2: memref<8x128xf32, #tpu.memory_space<vmem>>, %arg3: memref<128x128xf32, #tpu.memory_space<vmem>>, %arg4: memref<128x128xf32, #tpu.memory_space<vmem>>, %arg5: memref<128x256xf32, #tpu.memory_space<vmem>>, %arg6: memref<128x128xf32, #tpu.memory_space<vmem>>, %arg7: memref<8x128xf32, #tpu.memory_space<vmem>>, %arg8: memref<8x128xf32, #tpu.memory_space<vmem>>, %arg9: memref<8x256xf32, #tpu.memory_space<vmem>>) attributes {dimension_semantics = [#tpu.dimension_semantics<parallel>], iteration_bounds = array<i64: 1>, scalar_prefetch = 0 : i64, scratch_operands = 0 : i64, tpu.core_type = #tpu.core_type<tc>, window_params = [{transform_indices = @transform_0, window_bounds = array<i64: 8, 128>}, {transform_indices = @transform_1, window_bounds = array<i64: 8, 128>}, {pipeline_mode = #tpu.pipeline_mode<synchronous>, transform_indices = @transform_2, window_bounds = array<i64: 128, 128>}, {pipeline_mode = #tpu.pipeline_mode<synchronous>, transform_indices = @transform_3, window_bounds = array<i64: 128, 128>}, {pipeline_mode = #tpu.pipeline_mode<synchronous>, transform_indices = @transform_4, window_bounds = array<i64: 128, 256>}, {pipeline_mode = #tpu.pipeline_mode<synchronous>, transform_indices = @transform_5, window_bounds = array<i64: 128, 128>}, {pipeline_mode = #tpu.pipeline_mode<synchronous>, transform_indices = @transform_6, window_bounds = array<i64: 8, 128>}, {transform_indices = @transform_7, window_bounds = array<i64: 8, 128>}, {transform_indices = @transform_8, window_bounds = array<i64: 8, 256>}]} {
    %c0 = arith.constant 0 : index
    %c0_0 = arith.constant 0 : index
    %0 = vector.load %arg1[%c0, %c0_0] : memref<8x128xf32, #tpu.memory_space<vmem>>, vector<8x128xf32>
    %c0_1 = arith.constant 0 : index
    %c0_2 = arith.constant 0 : index
    %1 = vector.load %arg3[%c0_1, %c0_2] : memref<128x128xf32, #tpu.memory_space<vmem>>, vector<128x128xf32>
    %cst = arith.constant dense<0.000000e+00> : vector<8x128xf32>
    %2 = tpu.matmul %0, %1, %cst {dimension_numbers = #tpu.dot_dimension_numbers<[1], [0], [0], [1], [0, 0, 1, 1], [], []>} : vector<8x128xf32>, vector<128x128xf32>, vector<8x128xf32> -> vector<8x128xf32>
    %cst_3 = arith.constant 0.000000e+00 : f32
    %3 = vector.broadcast %cst_3 : f32 to vector<8x128xf32>
    %4 = arith.maximumf %2, %3 : vector<8x128xf32>
    %c0_4 = arith.constant 0 : index
    %c0_5 = arith.constant 0 : index
    %5 = vector.load %arg7[%c0_4, %c0_5] : memref<8x128xf32, #tpu.memory_space<vmem>>, vector<1x128xf32>
    %6 = vector.broadcast %5 : vector<1x128xf32> to vector<8x128xf32>
    %7 = arith.mulf %4, %6 : vector<8x128xf32>
    %c1 = arith.constant 1 : index
    %c0_6 = arith.constant 0 : index
    %8 = vector.load %arg7[%c1, %c0_6] : memref<8x128xf32, #tpu.memory_space<vmem>>, vector<1x128xf32>
    %9 = vector.broadcast %8 : vector<1x128xf32> to vector<8x128xf32>
    %10 = arith.addf %7, %9 : vector<8x128xf32>
    %c0_7 = arith.constant 0 : index
    %c0_8 = arith.constant 0 : index
    %11 = vector.load %arg4[%c0_7, %c0_8] : memref<128x128xf32, #tpu.memory_space<vmem>>, vector<128x128xf32>
    %cst_9 = arith.constant dense<0.000000e+00> : vector<8x128xf32>
    %12 = tpu.matmul %10, %11, %cst_9 {dimension_numbers = #tpu.dot_dimension_numbers<[1], [0], [0], [1], [0, 0, 1, 1], [], []>} : vector<8x128xf32>, vector<128x128xf32>, vector<8x128xf32> -> vector<8x128xf32>
    %cst_10 = arith.constant 0.000000e+00 : f32
    %13 = vector.broadcast %cst_10 : f32 to vector<8x128xf32>
    %14 = arith.maximumf %12, %13 : vector<8x128xf32>
    %c2 = arith.constant 2 : index
    %c0_11 = arith.constant 0 : index
    %15 = vector.load %arg7[%c2, %c0_11] : memref<8x128xf32, #tpu.memory_space<vmem>>, vector<1x128xf32>
    %16 = vector.broadcast %15 : vector<1x128xf32> to vector<8x128xf32>
    %17 = arith.mulf %14, %16 : vector<8x128xf32>
    %c3 = arith.constant 3 : index
    %c0_12 = arith.constant 0 : index
    %18 = vector.load %arg7[%c3, %c0_12] : memref<8x128xf32, #tpu.memory_space<vmem>>, vector<1x128xf32>
    %19 = vector.broadcast %18 : vector<1x128xf32> to vector<8x128xf32>
    %20 = arith.addf %17, %19 : vector<8x128xf32>
    %c0_13 = arith.constant 0 : index
    %c0_14 = arith.constant 0 : index
    %21 = vector.load %arg5[%c0_13, %c0_14] : memref<128x256xf32, #tpu.memory_space<vmem>>, vector<128x256xf32>
    %cst_15 = arith.constant dense<0.000000e+00> : vector<8x256xf32>
    %22 = tpu.matmul %20, %21, %cst_15 {dimension_numbers = #tpu.dot_dimension_numbers<[1], [0], [0], [1], [0, 0, 1, 1], [], []>} : vector<8x128xf32>, vector<128x256xf32>, vector<8x256xf32> -> vector<8x256xf32>
    %23 = vector.extract_strided_slice %22 {offsets = [0, 0], sizes = [8, 128], strides = [1, 1]} : vector<8x256xf32> to vector<8x128xf32>
    %c4 = arith.constant 4 : index
    %c0_16 = arith.constant 0 : index
    %24 = vector.load %arg7[%c4, %c0_16] : memref<8x128xf32, #tpu.memory_space<vmem>>, vector<1x128xf32>
    %25 = vector.broadcast %24 : vector<1x128xf32> to vector<8x128xf32>
    %26 = arith.addf %23, %25 : vector<8x128xf32>
    %27 = vector.extract_strided_slice %22 {offsets = [0, 128], sizes = [8, 128], strides = [1, 1]} : vector<8x256xf32> to vector<8x128xf32>
    %c5 = arith.constant 5 : index
    %c0_17 = arith.constant 0 : index
    %28 = vector.load %arg7[%c5, %c0_17] : memref<8x128xf32, #tpu.memory_space<vmem>>, vector<1x128xf32>
    %29 = vector.broadcast %28 : vector<1x128xf32> to vector<8x128xf32>
    %30 = arith.addf %27, %29 : vector<8x128xf32>
    %c0_18 = arith.constant 0 : index
    %c0_19 = arith.constant 0 : index
    %31 = vector.load %arg2[%c0_18, %c0_19] : memref<8x128xf32, #tpu.memory_space<vmem>>, vector<8x128xf32>
    %cst_20 = arith.constant 5.000000e-01 : f32
    %32 = vector.broadcast %cst_20 : f32 to vector<8x128xf32>
    %33 = arith.mulf %32, %30 : vector<8x128xf32>
    %34 = math.exp %33 : vector<8x128xf32>
    %35 = arith.mulf %31, %34 : vector<8x128xf32>
    %36 = arith.addf %35, %26 : vector<8x128xf32>
    %c0_21 = arith.constant 0 : index
    %c0_22 = arith.constant 0 : index
    %37 = vector.load %arg6[%c0_21, %c0_22] : memref<128x128xf32, #tpu.memory_space<vmem>>, vector<128x128xf32>
    %cst_23 = arith.constant dense<0.000000e+00> : vector<8x128xf32>
    %38 = tpu.matmul %36, %37, %cst_23 {dimension_numbers = #tpu.dot_dimension_numbers<[1], [0], [0], [1], [0, 0, 1, 1], [], []>} : vector<8x128xf32>, vector<128x128xf32>, vector<8x128xf32> -> vector<8x128xf32>
    %cst_24 = arith.constant 0.000000e+00 : f32
    %39 = vector.broadcast %cst_24 : f32 to vector<8x128xf32>
    %40 = arith.maximumf %38, %39 : vector<8x128xf32>
    %c6 = arith.constant 6 : index
    %c0_25 = arith.constant 0 : index
    %41 = vector.load %arg7[%c6, %c0_25] : memref<8x128xf32, #tpu.memory_space<vmem>>, vector<1x128xf32>
    %42 = vector.broadcast %41 : vector<1x128xf32> to vector<8x128xf32>
    %43 = arith.mulf %40, %42 : vector<8x128xf32>
    %c7 = arith.constant 7 : index
    %c0_26 = arith.constant 0 : index
    %44 = vector.load %arg7[%c7, %c0_26] : memref<8x128xf32, #tpu.memory_space<vmem>>, vector<1x128xf32>
    %45 = vector.broadcast %44 : vector<1x128xf32> to vector<8x128xf32>
    %46 = arith.addf %43, %45 : vector<8x128xf32>
    %c0_27 = arith.constant 0 : index
    %c0_28 = arith.constant 0 : index
    %47 = vector.load %arg8[%c0_27, %c0_28] : memref<8x128xf32, #tpu.memory_space<vmem>>, vector<8x128xf32>
    tpu.vector_store %arg8[%c0_27, %c0_28], %46 {strides = array<i32>} : memref<8x128xf32, #tpu.memory_space<vmem>>, vector<8x128xf32>,
    %c0_29 = arith.constant 0 : index
    %c0_30 = arith.constant 0 : index
    %48 = vector.load %arg9[%c0_29, %c0_30] : memref<8x256xf32, #tpu.memory_space<vmem>>, vector<8x128xf32>
    tpu.vector_store %arg9[%c0_29, %c0_30], %26 {strides = array<i32>} : memref<8x256xf32, #tpu.memory_space<vmem>>, vector<8x128xf32>,
    %c0_31 = arith.constant 0 : index
    %c128 = arith.constant 128 : index
    %49 = vector.load %arg9[%c0_31, %c128] : memref<8x256xf32, #tpu.memory_space<vmem>>, vector<8x128xf32>
    tpu.vector_store %arg9[%c0_31, %c128], %30 {strides = array<i32>} : memref<8x256xf32, #tpu.memory_space<vmem>>, vector<8x128xf32>,
    return
  }
  func.func @transform_0(%arg0: i32) -> (i32, i32) {
    %c0_i32 = arith.constant 0 : i32
    %c0_i32_0 = arith.constant 0 : i32
    return %arg0, %c0_i32 : i32, i32
  }
  func.func @transform_1(%arg0: i32) -> (i32, i32) {
    %c0_i32 = arith.constant 0 : i32
    %c0_i32_0 = arith.constant 0 : i32
    return %arg0, %c0_i32 : i32, i32
  }
  func.func @transform_2(%arg0: i32) -> (i32, i32) {
    %c0_i32 = arith.constant 0 : i32
    %c0_i32_0 = arith.constant 0 : i32
    %c0_i32_1 = arith.constant 0 : i32
    return %c0_i32, %c0_i32_0 : i32, i32
  }
  func.func @transform_3(%arg0: i32) -> (i32, i32) {
    %c0_i32 = arith.constant 0 : i32
    %c0_i32_0 = arith.constant 0 : i32
    %c0_i32_1 = arith.constant 0 : i32
    return %c0_i32, %c0_i32_0 : i32, i32
  }
  func.func @transform_4(%arg0: i32) -> (i32, i32) {
    %c0_i32 = arith.constant 0 : i32
    %c0_i32_0 = arith.constant 0 : i32
    %c0_i32_1 = arith.constant 0 : i32
    return %c0_i32, %c0_i32_0 : i32, i32
  }
  func.func @transform_5(%arg0: i32) -> (i32, i32) {
    %c0_i32 = arith.constant 0 : i32
    %c0_i32_0 = arith.constant 0 : i32
    %c0_i32_1 = arith.constant 0 : i32
    return %c0_i32, %c0_i32_0 : i32, i32
  }
  func.func @transform_6(%arg0: i32) -> (i32, i32) {
    %c0_i32 = arith.constant 0 : i32
    %c0_i32_0 = arith.constant 0 : i32
    %c0_i32_1 = arith.constant 0 : i32
    return %c0_i32, %c0_i32_0 : i32, i32
  }
  func.func @transform_7(%arg0: i32) -> (i32, i32) {
    %c0_i32 = arith.constant 0 : i32
    %c0_i32_0 = arith.constant 0 : i32
    return %arg0, %c0_i32 : i32, i32
  }
  func.func @transform_8(%arg0: i32) -> (i32, i32) {
    %c0_i32 = arith.constant 0 : i32
    %c0_i32_0 = arith.constant 0 : i32
    return %arg0, %c0_i32 : i32, i32
  }
}

</mosaic_0001>

<llo_original>
// kernel: tpu_custom_call.1
$region0: #{tpu_custom_call.1}
  #allocation0 [shape = 'u32[]', space=smem, size = 0x4, offset = 0x4, fixed_abs, tag = 'smem constant byte address 0x4 - core index']
  #allocation1 [shape = 'u32[144,128]{1,0:T(1,128)}', space=vmem, size = 0x12000, scoped, tag = 'internal scratch']
  %s0 = inlined_call_operand.hbm [shape: f32[8,128], index: 0, kind: input, shape index: {}]
  %s1 = inlined_call_operand.hbm [shape: f32[8,128], index: 1, kind: input, shape index: {}]
  %s2 = inlined_call_operand.hbm [shape: f32[128,128], index: 2, kind: input, shape index: {}]
  %s3 = inlined_call_operand.hbm [shape: f32[128,128], index: 3, kind: input, shape index: {}]
  %s4 = inlined_call_operand.hbm [shape: f32[128,256], index: 4, kind: input, shape index: {}]
  %s5 = inlined_call_operand.hbm [shape: f32[128,128], index: 5, kind: input, shape index: {}]
  %s6 = inlined_call_operand.vmem [shape: f32[8,128], index: 6, kind: input, shape index: {}]
  %s7 = inlined_call_operand.hbm [shape: f32[8,128], index: 7, kind: output, shape index: {0}]
  %s8 = inlined_call_operand.hbm [shape: f32[8,256], index: 8, kind: output, shape index: {1}]
  %9 = xla_tuple %s7, %s8
  %s10 = sld [smem:[#allocation0]]
  $region70: #{tpu_custom_call.1} parent=0
    _
  %s12 = ssub.s32 1, %s10
  %s13 = scalar_select 0, %s12, %s10
  $region1: #{tpu_custom_call.1} parent=0
    #allocation2 [shape = 'u8[4096]{0}', space=vmem, size = 0x1000, scoped, tag = 'input window, operand 0, single buffered']
    #allocation3 [shape = 's32[1]{0}', space=sflag, size = 0x4, scoped, tag = 'scoped memory for tpu_custom_call.1']
    #allocation4 [shape = 's32[1]{0}', space=sflag, size = 0x4, scoped, tag = 'scoped memory for tpu_custom_call.1']
    #allocation5 [shape = 'u8[4096]{0}', space=vmem, size = 0x1000, scoped, tag = 'input window, operand 1, single buffered']
    #allocation6 [shape = 's32[1]{0}', space=sflag, size = 0x4, scoped, tag = 'scoped memory for tpu_custom_call.1']
    #allocation7 [shape = 'u8[65536]{0}', space=vmem, size = 0x10000, scoped, tag = 'input window, operand 2, single buffered']
    #allocation8 [shape = 'u8[65536]{0}', space=vmem, size = 0x10000, scoped, tag = 'input window, operand 3, single buffered']
    #allocation9 [shape = 's32[1]{0}', space=sflag, size = 0x4, scoped, tag = 'scoped memory for tpu_custom_call.1']
    #allocation10 [shape = 'u8[131072]{0}', space=vmem, size = 0x20000, scoped, tag = 'input window, operand 4, single buffered']
    #allocation11 [shape = 'u8[65536]{0}', space=vmem, size = 0x10000, scoped, tag = 'input window, operand 5, single buffered']
    #allocation12 [shape = 's32[1]{0}', space=sflag, size = 0x4, scoped, tag = 'scoped memory for tpu_custom_call.1']
    #allocation13 [shape = 'u8[4096]{0}', space=vmem, size = 0x1000, scoped, tag = 'output window, operand 0, single buffered']
    #allocation14 [shape = 'u8[8192]{0}', space=vmem, size = 0x2000, scoped, tag = 'output window, operand 1, single buffered']
    #allocation15 [shape = 's32[1]{0}', space=sflag, size = 0x4, scoped, tag = 'scoped memory for tpu_custom_call.1']
    %14 = vsyncpa [#allocation3], 0
    %15 = vsyncpa [#allocation6], 0
    %16 = vsyncpa [#allocation9], 0
    %17 = vsyncpa [#allocation12], 0
    %18 = vsyncpa [#allocation4], 0
    %19 = vsyncpa [#allocation15], 0
    // Predicated region
    $region2: #{tpu_custom_call.1} parent=1 // pred_check
      _
    $region3: #{tpu_custom_call.1} parent=1 // pred_check_branch
      %21 = sbr.rel (0) target = $region5
    $region4: #{tpu_custom_call.1} parent=1 // pred_region
      %s23 = ssub.s32 128, 128
      %24 = vsyncadd [#allocation3], %s23
      %s26 = sshll.u32 [#allocation2], 4
      %s27 = int_to_ptr.vmem [resolvable:$true] %s26
      %29 = dma.hbm_to_vmem [thread:$0]  %s0, 128, %s27, [#allocation3]
    $region5: #{tpu_custom_call.1} parent=1 // pred_fallthru
      _
    // Predicated region
    $region6: #{tpu_custom_call.1} parent=1 // pred_check
      _
    $region7: #{tpu_custom_call.1} parent=1 // pred_check_branch
      %31 = sbr.rel (0) target = $region9
    $region8: #{tpu_custom_call.1} parent=1 // pred_region
      %s33 = ssub.s32 128, 128
      %34 = vsyncadd [#allocation6], %s33
      %s36 = sshll.u32 [#allocation5], 4
      %s37 = int_to_ptr.vmem [resolvable:$true] %s36
      %39 = dma.hbm_to_vmem [thread:$0]  %s1, 128, %s37, [#allocation6]
    $region9: #{tpu_custom_call.1} parent=1 // pred_fallthru
      _
    // Predicated region
    $region10: #{tpu_custom_call.1} parent=1 // pred_check
      _
    $region11: #{tpu_custom_call.1} parent=1 // pred_check_branch
      %41 = sbr.rel (0) target = $region13
    $region12: #{tpu_custom_call.1} parent=1 // pred_region
      %s43 = ssub.s32 2048, 2048
      %44 = vsyncadd [#allocation6], %s43
      %s45 = sshll.u32 [#allocation7], 4
      %s46 = int_to_ptr.vmem [resolvable:$true] %s45
      %51 = dma.hbm_to_vmem [thread:$0]  %s2, 2048, %s46, [#allocation6], 128, 128, 8
    $region13: #{tpu_custom_call.1} parent=1 // pred_fallthru
      _
    // Predicated region
    $region14: #{tpu_custom_call.1} parent=1 // pred_check
      _
    $region15: #{tpu_custom_call.1} parent=1 // pred_check_branch
      %53 = sbr.rel (0) target = $region17
    $region16: #{tpu_custom_call.1} parent=1 // pred_region
      %s55 = ssub.s32 2048, 2048
      %56 = vsyncadd [#allocation9], %s55
      %s57 = sshll.u32 [#allocation8], 4
      %s58 = int_to_ptr.vmem [resolvable:$true] %s57
      %63 = dma.hbm_to_vmem [thread:$0]  %s3, 2048, %s58, [#allocation9], 128, 128, 8
    $region17: #{tpu_custom_call.1} parent=1 // pred_fallthru
      _
    // Predicated region
    $region18: #{tpu_custom_call.1} parent=1 // pred_check
      _
    $region19: #{tpu_custom_call.1} parent=1 // pred_check_branch
      %65 = sbr.rel (0) target = $region21
    $region20: #{tpu_custom_call.1} parent=1 // pred_region
      %s67 = ssub.s32 4096, 4096
      %68 = vsyncadd [#allocation9], %s67
      %s69 = sshll.u32 [#allocation10], 4
      %s70 = int_to_ptr.vmem [resolvable:$true] %s69
      %75 = dma.hbm_to_vmem [thread:$0]  %s4, 4096, %s70, [#allocation9], 256, 256, 16
    $region21: #{tpu_custom_call.1} parent=1 // pred_fallthru
      _
    // Predicated region
    $region22: #{tpu_custom_call.1} parent=1 // pred_check
      _
    $region23: #{tpu_custom_call.1} parent=1 // pred_check_branch
      %77 = sbr.rel (0) target = $region25
    $region24: #{tpu_custom_call.1} parent=1 // pred_region
      %s79 = ssub.s32 2048, 2048
      %80 = vsyncadd [#allocation12], %s79
      %s81 = sshll.u32 [#allocation11], 4
      %s82 = int_to_ptr.vmem [resolvable:$true] %s81
      %87 = dma.hbm_to_vmem [thread:$0]  %s5, 2048, %s82, [#allocation12], 128, 128, 8
    $region25: #{tpu_custom_call.1} parent=1 // pred_fallthru
      _
    // Predicated region
    $region26: #{tpu_custom_call.1} parent=1 // pred_check
      _
    $region27: #{tpu_custom_call.1} parent=1 // pred_check_branch
      %89 = sbr.rel (0) target = $region29
    $region28: #{tpu_custom_call.1} parent=1 // pred_region
      _
    $region29: #{tpu_custom_call.1} parent=1 // pred_fallthru
      _
    // Predicated region
    $region30: #{tpu_custom_call.1} parent=1 // pred_check
      _
    $region31: #{tpu_custom_call.1} parent=1 // pred_check_branch
      %91 = sbr.rel (0) target = $region33
    $region32: #{tpu_custom_call.1} parent=1 // pred_region
      %92 = dma.done [#allocation3], 128
    $region33: #{tpu_custom_call.1} parent=1 // pred_fallthru
      _
    // Predicated region
    $region34: #{tpu_custom_call.1} parent=1 // pred_check
      _
    $region35: #{tpu_custom_call.1} parent=1 // pred_check_branch
      %94 = sbr.rel (0) target = $region37
    $region36: #{tpu_custom_call.1} parent=1 // pred_region
      %95 = dma.done [#allocation6], 128
    $region37: #{tpu_custom_call.1} parent=1 // pred_fallthru
      _
    // Predicated region
    $region38: #{tpu_custom_call.1} parent=1 // pred_check
      _
    $region39: #{tpu_custom_call.1} parent=1 // pred_check_branch
      %97 = sbr.rel (0) target = $region41
    $region40: #{tpu_custom_call.1} parent=1 // pred_region
      %98 = dma.done [#allocation6], 2048
    $region41: #{tpu_custom_call.1} parent=1 // pred_fallthru
      _
    // Predicated region
    $region42: #{tpu_custom_call.1} parent=1 // pred_check
      _
    $region43: #{tpu_custom_call.1} parent=1 // pred_check_branch
      %100 = sbr.rel (0) target = $region45
    $region44: #{tpu_custom_call.1} parent=1 // pred_region
      %101 = dma.done [#allocation9], 2048
    $region45: #{tpu_custom_call.1} parent=1 // pred_fallthru
      _
    // Predicated region
    $region46: #{tpu_custom_call.1} parent=1 // pred_check
      _
    $region47: #{tpu_custom_call.1} parent=1 // pred_check_branch
      %103 = sbr.rel (0) target = $region49
    $region48: #{tpu_custom_call.1} parent=1 // pred_region
      %104 = dma.done [#allocation9], 4096
    $region49: #{tpu_custom_call.1} parent=1 // pred_fallthru
      _
    // Predicated region
    $region50: #{tpu_custom_call.1} parent=1 // pred_check
      _
    $region51: #{tpu_custom_call.1} parent=1 // pred_check_branch
      %106 = sbr.rel (0) target = $region53
    $region52: #{tpu_custom_call.1} parent=1 // pred_region
      %107 = dma.done [#allocation12], 2048
    $region53: #{tpu_custom_call.1} parent=1 // pred_fallthru
      _
    %v108 = vld [vmem:[#allocation2] sm:$0xff]
    %v109 = vld [vmem:[#allocation7] sm:$0xff]
    %v110 = vld [vmem:[#allocation7 + $0x8] sm:$0xff]
    %v111 = vld [vmem:[#allocation7 + $0x10] sm:$0xff]
    %v112 = vld [vmem:[#allocation7 + $0x18] sm:$0xff]
    %v113 = vld [vmem:[#allocation7 + $0x20] sm:$0xff]
    %v114 = vld [vmem:[#allocation7 + $0x28] sm:$0xff]
    %v115 = vld [vmem:[#allocation7 + $0x30] sm:$0xff]
    %v116 = vld [vmem:[#allocation7 + $0x38] sm:$0xff]
    %v117 = vld [vmem:[#allocation7 + $0x40] sm:$0xff]
    %v118 = vld [vmem:[#allocation7 + $0x48] sm:$0xff]
    %v119 = vld [vmem:[#allocation7 + $0x50] sm:$0xff]
    %v120 = vld [vmem:[#allocation7 + $0x58] sm:$0xff]
    %v121 = vld [vmem:[#allocation7 + $0x60] sm:$0xff]
    %v122 = vld [vmem:[#allocation7 + $0x68] sm:$0xff]
    %v123 = vld [vmem:[#allocation7 + $0x70] sm:$0xff]
    %v124 = vld [vmem:[#allocation7 + $0x78] sm:$0xff]
    %125 = vmatprep.subr.mxu0 0.0
    %126 = vmatpush1.msra.mxu0 %v109
    %127 = vmatprep.subr.mxu0 0.0
    %128 = vmatpush1.msra.mxu0 %v110
    %129 = vmatprep.subr.mxu0 0.0
    %130 = vmatpush1.msra.mxu0 %v111
    %131 = vmatprep.subr.mxu0 0.0
    %132 = vmatpush1.msra.mxu0 %v112
    %133 = vmatprep.subr.mxu0 0.0
    %134 = vmatpush1.msra.mxu0 %v113
    %135 = vmatprep.subr.mxu0 0.0
    %136 = vmatpush1.msra.mxu0 %v114
    %137 = vmatprep.subr.mxu0 0.0
    %138 = vmatpush1.msra.mxu0 %v115
    %139 = vmatprep.subr.mxu0 0.0
    %140 = vmatpush1.msra.mxu0 %v116
    %141 = vmatprep.subr.mxu0 0.0
    %142 = vmatpush1.msra.mxu0 %v117
    %143 = vmatprep.subr.mxu0 0.0
    %144 = vmatpush1.msra.mxu0 %v118
    %145 = vmatprep.subr.mxu0 0.0
    %146 = vmatpush1.msra.mxu0 %v119
    %147 = vmatprep.subr.mxu0 0.0
    %148 = vmatpush1.msra.mxu0 %v120
    %149 = vmatprep.subr.mxu0 0.0
    %150 = vmatpush1.msra.mxu0 %v121
    %151 = vmatprep.subr.mxu0 0.0
    %152 = vmatpush1.msra.mxu0 %v122
    %153 = vmatprep.subr.mxu0 0.0
    %154 = vmatpush1.msra.mxu0 %v123
    %155 = vmatprep.subr.mxu0 0.0
    %156 = vmatpush1.msra.mxu0 %v124
    %157 = vmatprep.subr.mxu0 0.0
    %158 = vmatpush1.msra.mxu0 0.0
    %159 = vmatprep.subr.mxu0 0.0
    %160 = vmatpush1.msra.mxu0 0.0
    %161 = vmatprep.subr.mxu0 0.0
    %162 = vmatpush1.msra.mxu0 0.0
    %163 = vmatprep.subr.mxu0 0.0
    %164 = vmatpush1.msra.mxu0 0.0
    %165 = vmatprep.subr.mxu0 0.0
    %166 = vmatpush1.msra.mxu0 0.0
    %167 = vmatprep.subr.mxu0 0.0
    %168 = vmatpush1.msra.mxu0 0.0
    %169 = vmatprep.subr.mxu0 0.0
    %170 = vmatpush1.msra.mxu0 0.0
    %171 = vmatprep.subr.mxu0 0.0
    %172 = vmatpush1.msra.mxu0 0.0
    %173 = vmatprep.subr.mxu0 0.0
    %174 = vmatpush1.msra.mxu0 0.0
    %175 = vmatprep.subr.mxu0 0.0
    %176 = vmatpush1.msra.mxu0 0.0
    %177 = vmatprep.subr.mxu0 0.0
    %178 = vmatpush1.msra.mxu0 0.0
    %179 = vmatprep.subr.mxu0 0.0
    %180 = vmatpush1.msra.mxu0 0.0
    %181 = vmatprep.subr.mxu0 0.0
    %182 = vmatpush1.msra.mxu0 0.0
    %183 = vmatprep.subr.mxu0 0.0
    %184 = vmatpush1.msra.mxu0 0.0
    %185 = vmatprep.subr.mxu0 0.0
    %186 = vmatpush1.msra.mxu0 0.0
    %187 = vmatprep.subr.mxu0 0.0
    %188 = vmatpush1.msra.mxu0 0.0
    %189 = vmatprep.mubr.f32.mxu0 0.0
    %190 = vmatmul.mubr.f32.gmra.mrb[0].mxu0 %v108
    %v191 = vpop.f32.mrb[0].mxu0
    %v192 = vadd.f32 0.0, %v191
    %v193 = vpop.f32.mrb[0].mxu0
    %194 = vdwg.mxu0
    %v195 = vmax.f32 %v192, 0.0
    %v196 = vld [vmem:[%s6] sm:$0x1]
    %v197 = vlaneseq
    %v198 = vshrl.u32 %v197, 7
    %v199 = vsub.s32 0, %v198
    %v200 = vrot.slane %v196, %v199
    %v201 = vmul.f32 %v195, %v200
    %v202 = vld [vmem:[%s6 + $0x1] sm:$0x1]
    %v203 = vlaneseq
    %v204 = vshrl.u32 %v203, 7
    %v205 = vsub.s32 0, %v204
    %v206 = vrot.slane %v202, %v205
    %v207 = vadd.f32 %v201, %v206
    %v208 = vld [vmem:[#allocation8] sm:$0xff]
    %v209 = vld [vmem:[#allocation8 + $0x8] sm:$0xff]
    %v210 = vld [vmem:[#allocation8 + $0x10] sm:$0xff]
    %v211 = vld [vmem:[#allocation8 + $0x18] sm:$0xff]
    %v212 = vld [vmem:[#allocation8 + $0x20] sm:$0xff]
    %v213 = vld [vmem:[#allocation8 + $0x28] sm:$0xff]
    %v214 = vld [vmem:[#allocation8 + $0x30] sm:$0xff]
    %v215 = vld [vmem:[#allocation8 + $0x38] sm:$0xff]
    %v216 = vld [vmem:[#allocation8 + $0x40] sm:$0xff]
    %v217 = vld [vmem:[#allocation8 + $0x48] sm:$0xff]
    %v218 = vld [vmem:[#allocation8 + $0x50] sm:$0xff]
    %v219 = vld [vmem:[#allocation8 + $0x58] sm:$0xff]
    %v220 = vld [vmem:[#allocation8 + $0x60] sm:$0xff]
    %v221 = vld [vmem:[#allocation8 + $0x68] sm:$0xff]
    %v222 = vld [vmem:[#allocation8 + $0x70] sm:$0xff]
    %v223 = vld [vmem:[#allocation8 + $0x78] sm:$0xff]
    %224 = vmatprep.subr.mxu0 0.0
    %225 = vmatpush1.msra.mxu0 %v208
    %226 = vmatprep.subr.mxu0 0.0
    %227 = vmatpush1.msra.mxu0 %v209
    %228 = vmatprep.subr.mxu0 0.0
    %229 = vmatpush1.msra.mxu0 %v210
    %230 = vmatprep.subr.mxu0 0.0
    %231 = vmatpush1.msra.mxu0 %v211
    %232 = vmatprep.subr.mxu0 0.0
    %233 = vmatpush1.msra.mxu0 %v212
    %234 = vmatprep.subr.mxu0 0.0
    %235 = vmatpush1.msra.mxu0 %v213
    %236 = vmatprep.subr.mxu0 0.0
    %237 = vmatpush1.msra.mxu0 %v214
    %238 = vmatprep.subr.mxu0 0.0
    %239 = vmatpush1.msra.mxu0 %v215
    %240 = vmatprep.subr.mxu0 0.0
    %241 = vmatpush1.msra.mxu0 %v216
    %242 = vmatprep.subr.mxu0 0.0
    %243 = vmatpush1.msra.mxu0 %v217
    %244 = vmatprep.subr.mxu0 0.0
    %245 = vmatpush1.msra.mxu0 %v218
    %246 = vmatprep.subr.mxu0 0.0
    %247 = vmatpush1.msra.mxu0 %v219
    %248 = vmatprep.subr.mxu0 0.0
    %249 = vmatpush1.msra.mxu0 %v220
    %250 = vmatprep.subr.mxu0 0.0
    %251 = vmatpush1.msra.mxu0 %v221
    %252 = vmatprep.subr.mxu0 0.0
    %253 = vmatpush1.msra.mxu0 %v222
    %254 = vmatprep.subr.mxu0 0.0
    %255 = vmatpush1.msra.mxu0 %v223
    %256 = vmatprep.subr.mxu0 0.0
    %257 = vmatpush1.msra.mxu0 0.0
    %258 = vmatprep.subr.mxu0 0.0
    %259 = vmatpush1.msra.mxu0 0.0
    %260 = vmatprep.subr.mxu0 0.0
    %261 = vmatpush1.msra.mxu0 0.0
    %262 = vmatprep.subr.mxu0 0.0
    %263 = vmatpush1.msra.mxu0 0.0
    %264 = vmatprep.subr.mxu0 0.0
    %265 = vmatpush1.msra.mxu0 0.0
    %266 = vmatprep.subr.mxu0 0.0
    %267 = vmatpush1.msra.mxu0 0.0
    %268 = vmatprep.subr.mxu0 0.0
    %269 = vmatpush1.msra.mxu0 0.0
    %270 = vmatprep.subr.mxu0 0.0
    %271 = vmatpush1.msra.mxu0 0.0
    %272 = vmatprep.subr.mxu0 0.0
    %273 = vmatpush1.msra.mxu0 0.0
    %274 = vmatprep.subr.mxu0 0.0
    %275 = vmatpush1.msra.mxu0 0.0
    %276 = vmatprep.subr.mxu0 0.0
    %277 = vmatpush1.msra.mxu0 0.0
    %278 = vmatprep.subr.mxu0 0.0
    %279 = vmatpush1.msra.mxu0 0.0
    %280 = vmatprep.subr.mxu0 0.0
    %281 = vmatpush1.msra.mxu0 0.0
    %282 = vmatprep.subr.mxu0 0.0
    %283 = vmatpush1.msra.mxu0 0.0
    %284 = vmatprep.subr.mxu0 0.0
    %285 = vmatpush1.msra.mxu0 0.0
    %286 = vmatprep.subr.mxu0 0.0
    %287 = vmatpush1.msra.mxu0 0.0
    %288 = vmatprep.mubr.f32.mxu0 0.0
    %289 = vmatmul.mubr.f32.gmra.mrb[0].mxu0 %v207
    %v290 = vpop.f32.mrb[0].mxu0
    %v291 = vadd.f32 0.0, %v290
    %v292 = vpop.f32.mrb[0].mxu0
    %293 = vdwg.mxu0
    %v294 = vmax.f32 %v291, 0.0
    %v295 = vld [vmem:[%s6 + $0x2] sm:$0x1]
    %v296 = vlaneseq
    %v297 = vshrl.u32 %v296, 7
    %v298 = vsub.s32 0, %v297
    %v299 = vrot.slane %v295, %v298
    %v300 = vmul.f32 %v294, %v299
    %v301 = vld [vmem:[%s6 + $0x3] sm:$0x1]
    %v302 = vlaneseq
    %v303 = vshrl.u32 %v302, 7
    %v304 = vsub.s32 0, %v303
    %v305 = vrot.slane %v301, %v304
    %v306 = vadd.f32 %v300, %v305
    %v307 = vld [vmem:[#allocation10] sm:$0xff]
    %v308 = vld [vmem:[#allocation10 + $0x8] sm:$0xff]
    %v309 = vld [vmem:[#allocation10 + $0x10] sm:$0xff]
    %v310 = vld [vmem:[#allocation10 + $0x18] sm:$0xff]
    %v311 = vld [vmem:[#allocation10 + $0x20] sm:$0xff]
    %v312 = vld [vmem:[#allocation10 + $0x28] sm:$0xff]
    %v313 = vld [vmem:[#allocation10 + $0x30] sm:$0xff]
    %v314 = vld [vmem:[#allocation10 + $0x38] sm:$0xff]
    %v315 = vld [vmem:[#allocation10 + $0x40] sm:$0xff]
    %v316 = vld [vmem:[#allocation10 + $0x48] sm:$0xff]
    %v317 = vld [vmem:[#allocation10 + $0x50] sm:$0xff]
    %v318 = vld [vmem:[#allocation10 + $0x58] sm:$0xff]
    %v319 = vld [vmem:[#allocation10 + $0x60] sm:$0xff]
    %v320 = vld [vmem:[#allocation10 + $0x68] sm:$0xff]
    %v321 = vld [vmem:[#allocation10 + $0x70] sm:$0xff]
    %v322 = vld [vmem:[#allocation10 + $0x78] sm:$0xff]
    %v323 = vld [vmem:[#allocation10 + $0x80] sm:$0xff]
    %v324 = vld [vmem:[#allocation10 + $0x88] sm:$0xff]
    %v325 = vld [vmem:[#allocation10 + $0x90] sm:$0xff]
    %v326 = vld [vmem:[#allocation10 + $0x98] sm:$0xff]
    %v327 = vld [vmem:[#allocation10 + $0xa0] sm:$0xff]
    %v328 = vld [vmem:[#allocation10 + $0xa8] sm:$0xff]
    %v329 = vld [vmem:[#allocation10 + $0xb0] sm:$0xff]
    %v330 = vld [vmem:[#allocation10 + $0xb8] sm:$0xff]
    %v331 = vld [vmem:[#allocation10 + $0xc0] sm:$0xff]
    %v332 = vld [vmem:[#allocation10 + $0xc8] sm:$0xff]
    %v333 = vld [vmem:[#allocation10 + $0xd0] sm:$0xff]
    %v334 = vld [vmem:[#allocation10 + $0xd8] sm:$0xff]
    %v335 = vld [vmem:[#allocation10 + $0xe0] sm:$0xff]
    %v336 = vld [vmem:[#allocation10 + $0xe8] sm:$0xff]
    %v337 = vld [vmem:[#allocation10 + $0xf0] sm:$0xff]
    %v338 = vld [vmem:[#allocation10 + $0xf8] sm:$0xff]
    %339 = vmatprep.subr.mxu0 %v308
    %340 = vmatpush1.msra.mxu0 %v307
    %341 = vmatprep.subr.mxu0 %v310
    %342 = vmatpush1.msra.mxu0 %v309
    %343 = vmatprep.subr.mxu0 %v312
    %344 = vmatpush1.msra.mxu0 %v311
    %345 = vmatprep.subr.mxu0 %v314
    %346 = vmatpush1.msra.mxu0 %v313
    %347 = vmatprep.subr.mxu0 %v316
    %348 = vmatpush1.msra.mxu0 %v315
    %349 = vmatprep.subr.mxu0 %v318
    %350 = vmatpush1.msra.mxu0 %v317
    %351 = vmatprep.subr.mxu0 %v320
    %352 = vmatpush1.msra.mxu0 %v319
    %353 = vmatprep.subr.mxu0 %v322
    %354 = vmatpush1.msra.mxu0 %v321
    %355 = vmatprep.subr.mxu0 %v324
    %356 = vmatpush1.msra.mxu0 %v323
    %357 = vmatprep.subr.mxu0 %v326
    %358 = vmatpush1.msra.mxu0 %v325
    %359 = vmatprep.subr.mxu0 %v328
    %360 = vmatpush1.msra.mxu0 %v327
    %361 = vmatprep.subr.mxu0 %v330
    %362 = vmatpush1.msra.mxu0 %v329
    %363 = vmatprep.subr.mxu0 %v332
    %364 = vmatpush1.msra.mxu0 %v331
    %365 = vmatprep.subr.mxu0 %v334
    %366 = vmatpush1.msra.mxu0 %v333
    %367 = vmatprep.subr.mxu0 %v336
    %368 = vmatpush1.msra.mxu0 %v335
    %369 = vmatprep.subr.mxu0 %v338
    %370 = vmatpush1.msra.mxu0 %v337
    %371 = vmatprep.subr.mxu0 0.0
    %372 = vmatpush1.msra.mxu0 0.0
    %373 = vmatprep.subr.mxu0 0.0
    %374 = vmatpush1.msra.mxu0 0.0
    %375 = vmatprep.subr.mxu0 0.0
    %376 = vmatpush1.msra.mxu0 0.0
    %377 = vmatprep.subr.mxu0 0.0
    %378 = vmatpush1.msra.mxu0 0.0
    %379 = vmatprep.subr.mxu0 0.0
    %380 = vmatpush1.msra.mxu0 0.0
    %381 = vmatprep.subr.mxu0 0.0
    %382 = vmatpush1.msra.mxu0 0.0
    %383 = vmatprep.subr.mxu0 0.0
    %384 = vmatpush1.msra.mxu0 0.0
    %385 = vmatprep.subr.mxu0 0.0
    %386 = vmatpush1.msra.mxu0 0.0
    %387 = vmatprep.subr.mxu0 0.0
    %388 = vmatpush1.msra.mxu0 0.0
    %389 = vmatprep.subr.mxu0 0.0
    %390 = vmatpush1.msra.mxu0 0.0
    %391 = vmatprep.subr.mxu0 0.0
    %392 = vmatpush1.msra.mxu0 0.0
    %393 = vmatprep.subr.mxu0 0.0
    %394 = vmatpush1.msra.mxu0 0.0
    %395 = vmatprep.subr.mxu0 0.0
    %396 = vmatpush1.msra.mxu0 0.0
    %397 = vmatprep.subr.mxu0 0.0
    %398 = vmatpush1.msra.mxu0 0.0
    %399 = vmatprep.subr.mxu0 0.0
    %400 = vmatpush1.msra.mxu0 0.0
    %401 = vmatprep.subr.mxu0 0.0
    %402 = vmatpush1.msra.mxu0 0.0
    %403 = vmatprep.mubr.f32.mxu0 0.0
    %404 = vmatmul.mubr.f32.gmra.mrb[0].mxu0 %v306
    %v405 = vpop.f32.mrb[0].mxu0
    %v406 = vadd.f32 0.0, %v405
    %v407 = vpop.f32.mrb[0].mxu0
    %v408 = vadd.f32 0.0, %v407
    %409 = vdwg.mxu0
    %v410 = vld [vmem:[%s6 + $0x4] sm:$0x1]
    %v411 = vlaneseq
    %v412 = vshrl.u32 %v411, 7
    %v413 = vsub.s32 0, %v412
    %v414 = vrot.slane %v410, %v413
    %v415 = vadd.f32 %v406, %v414
    %v416 = vld [vmem:[%s6 + $0x5] sm:$0x1]
    %v417 = vlaneseq
    %v418 = vshrl.u32 %v417, 7
    %v419 = vsub.s32 0, %v418
    %v420 = vrot.slane %v416, %v419
    %v421 = vadd.f32 %v408, %v420
    %v422 = vld [vmem:[#allocation5] sm:$0xff]
    %v423 = vmul.f32 %v421, 0.5
    %v424 = vmul.f32 %v423, 1.442695
    %v425 = vpow.pop %v424
    %v426 = vmul.f32 %v422, %v425
    %v427 = vadd.f32 %v426, %v415
    %v428 = vld [vmem:[#allocation11] sm:$0xff]
    %v429 = vld [vmem:[#allocation11 + $0x8] sm:$0xff]
    %v430 = vld [vmem:[#allocation11 + $0x10] sm:$0xff]
    %v431 = vld [vmem:[#allocation11 + $0x18] sm:$0xff]
    %v432 = vld [vmem:[#allocation11 + $0x20] sm:$0xff]
    %v433 = vld [vmem:[#allocation11 + $0x28] sm:$0xff]
    %v434 = vld [vmem:[#allocation11 + $0x30] sm:$0xff]
    %v435 = vld [vmem:[#allocation11 + $0x38] sm:$0xff]
    %v436 = vld [vmem:[#allocation11 + $0x40] sm:$0xff]
    %v437 = vld [vmem:[#allocation11 + $0x48] sm:$0xff]
    %v438 = vld [vmem:[#allocation11 + $0x50] sm:$0xff]
    %v439 = vld [vmem:[#allocation11 + $0x58] sm:$0xff]
    %v440 = vld [vmem:[#allocation11 + $0x60] sm:$0xff]
    %v441 = vld [vmem:[#allocation11 + $0x68] sm:$0xff]
    %v442 = vld [vmem:[#allocation11 + $0x70] sm:$0xff]
    %v443 = vld [vmem:[#allocation11 + $0x78] sm:$0xff]
    %444 = vmatprep.subr.mxu0 0.0
    %445 = vmatpush1.msra.mxu0 %v428
    %446 = vmatprep.subr.mxu0 0.0
    %447 = vmatpush1.msra.mxu0 %v429
    %448 = vmatprep.subr.mxu0 0.0
    %449 = vmatpush1.msra.mxu0 %v430
    %450 = vmatprep.subr.mxu0 0.0
    %451 = vmatpush1.msra.mxu0 %v431
    %452 = vmatprep.subr.mxu0 0.0
    %453 = vmatpush1.msra.mxu0 %v432
    %454 = vmatprep.subr.mxu0 0.0
    %455 = vmatpush1.msra.mxu0 %v433
    %456 = vmatprep.subr.mxu0 0.0
    %457 = vmatpush1.msra.mxu0 %v434
    %458 = vmatprep.subr.mxu0 0.0
    %459 = vmatpush1.msra.mxu0 %v435
    %460 = vmatprep.subr.mxu0 0.0
    %461 = vmatpush1.msra.mxu0 %v436
    %462 = vmatprep.subr.mxu0 0.0
    %463 = vmatpush1.msra.mxu0 %v437
    %464 = vmatprep.subr.mxu0 0.0
    %465 = vmatpush1.msra.mxu0 %v438
    %466 = vmatprep.subr.mxu0 0.0
    %467 = vmatpush1.msra.mxu0 %v439
    %468 = vmatprep.subr.mxu0 0.0
    %469 = vmatpush1.msra.mxu0 %v440
    %470 = vmatprep.subr.mxu0 0.0
    %471 = vmatpush1.msra.mxu0 %v441
    %472 = vmatprep.subr.mxu0 0.0
    %473 = vmatpush1.msra.mxu0 %v442
    %474 = vmatprep.subr.mxu0 0.0
    %475 = vmatpush1.msra.mxu0 %v443
    %476 = vmatprep.subr.mxu0 0.0
    %477 = vmatpush1.msra.mxu0 0.0
    %478 = vmatprep.subr.mxu0 0.0
    %479 = vmatpush1.msra.mxu0 0.0
    %480 = vmatprep.subr.mxu0 0.0
    %481 = vmatpush1.msra.mxu0 0.0
    %482 = vmatprep.subr.mxu0 0.0
    %483 = vmatpush1.msra.mxu0 0.0
    %484 = vmatprep.subr.mxu0 0.0
    %485 = vmatpush1.msra.mxu0 0.0
    %486 = vmatprep.subr.mxu0 0.0
    %487 = vmatpush1.msra.mxu0 0.0
    %488 = vmatprep.subr.mxu0 0.0
    %489 = vmatpush1.msra.mxu0 0.0
    %490 = vmatprep.subr.mxu0 0.0
    %491 = vmatpush1.msra.mxu0 0.0
    %492 = vmatprep.subr.mxu0 0.0
    %493 = vmatpush1.msra.mxu0 0.0
    %494 = vmatprep.subr.mxu0 0.0
    %495 = vmatpush1.msra.mxu0 0.0
    %496 = vmatprep.subr.mxu0 0.0
    %497 = vmatpush1.msra.mxu0 0.0
    %498 = vmatprep.subr.mxu0 0.0
    %499 = vmatpush1.msra.mxu0 0.0
    %500 = vmatprep.subr.mxu0 0.0
    %501 = vmatpush1.msra.mxu0 0.0
    %502 = vmatprep.subr.mxu0 0.0
    %503 = vmatpush1.msra.mxu0 0.0
    %504 = vmatprep.subr.mxu0 0.0
    %505 = vmatpush1.msra.mxu0 0.0
    %506 = vmatprep.subr.mxu0 0.0
    %507 = vmatpush1.msra.mxu0 0.0
    %508 = vmatprep.mubr.f32.mxu0 0.0
    %509 = vmatmul.mubr.f32.gmra.mrb[0].mxu0 %v427
    %v510 = vpop.f32.mrb[0].mxu0
    %v511 = vadd.f32 0.0, %v510
    %v512 = vpop.f32.mrb[0].mxu0
    %513 = vdwg.mxu0
    %v514 = vmax.f32 %v511, 0.0
    %v515 = vld [vmem:[%s6 + $0x6] sm:$0x1]
    %v516 = vlaneseq
    %v517 = vshrl.u32 %v516, 7
    %v518 = vsub.s32 0, %v517
    %v519 = vrot.slane %v515, %v518
    %v520 = vmul.f32 %v514, %v519
    %v521 = vld [vmem:[%s6 + $0x7] sm:$0x1]
    %v522 = vlaneseq
    %v523 = vshrl.u32 %v522, 7
    %v524 = vsub.s32 0, %v523
    %v525 = vrot.slane %v521, %v524
    %v526 = vadd.f32 %v520, %v525
    %527 = vst [vmem:[#allocation13] sm:$0xff] %v526
    %528 = vst [vmem:[#allocation14] sm:$0xff] %v415
    %529 = vst [vmem:[#allocation14 + $0x8] sm:$0xff] %v421
    // Predicated region
    $region54: #{tpu_custom_call.1} parent=1 // pred_check
      _
    $region55: #{tpu_custom_call.1} parent=1 // pred_check_branch
      %531 = sbr.rel (0) target = $region57
    $region56: #{tpu_custom_call.1} parent=1 // pred_region
      %s533 = ssub.s32 128, 128
      %534 = vsyncadd [#allocation4], %s533
      %s536 = sshll.u32 [#allocation13], 4
      %s537 = int_to_ptr.vmem [resolvable:$true] %s536
      %539 = dma.vmem_to_hbm [thread:$0]  %s537, 128, %s7, [#allocation4]
    $region57: #{tpu_custom_call.1} parent=1 // pred_fallthru
      _
    // Predicated region
    $region58: #{tpu_custom_call.1} parent=1 // pred_check
      _
    $region59: #{tpu_custom_call.1} parent=1 // pred_check_branch
      %541 = sbr.rel (0) target = $region61
    $region60: #{tpu_custom_call.1} parent=1 // pred_region
      %s543 = ssub.s32 256, 256
      %544 = vsyncadd [#allocation15], %s543
      %s546 = sshll.u32 [#allocation14], 4
      %s547 = int_to_ptr.vmem [resolvable:$true] %s546
      %549 = dma.vmem_to_hbm [thread:$0]  %s547, 256, %s8, [#allocation15]
    $region61: #{tpu_custom_call.1} parent=1 // pred_fallthru
      _
    // Predicated region
    $region62: #{tpu_custom_call.1} parent=1 // pred_check
      _
    $region63: #{tpu_custom_call.1} parent=1 // pred_check_branch
      %551 = sbr.rel (0) target = $region65
    $region64: #{tpu_custom_call.1} parent=1 // pred_region
      %552 = dma.done [#allocation4], 128
    $region65: #{tpu_custom_call.1} parent=1 // pred_fallthru
      _
    // Predicated region
    $region66: #{tpu_custom_call.1} parent=1 // pred_check
      _
    $region67: #{tpu_custom_call.1} parent=1 // pred_check_branch
      %554 = sbr.rel (0) target = $region69
    $region68: #{tpu_custom_call.1} parent=1 // pred_region
      %555 = dma.done [#allocation15], 256
    $region69: #{tpu_custom_call.1} parent=1 // pred_fallthru
      _
    %556 = vsyncpa [#allocation3], 1
    %557 = vsyncpa [#allocation6], 1
    %558 = vsyncpa [#allocation9], 1
    %559 = vsyncpa [#allocation12], 1
    %560 = vsyncpa [#allocation4], 1
    %561 = vsyncpa [#allocation15], 1

</llo_original>
